<compile_context>
chip_gen: v7x
topology: tpu7x:2x2x1
jax: 0.10.0
libtpu: 0.0.40
codegen_flags: <defaults>
</compile_context>

<pallas_src>
import jax
import jax.numpy as jnp
import numpy as np
from jax.experimental import pallas as pl
from jax.experimental.pallas import tpu as pltpu

EPS = 1e-5


def resnet_block(x_nchw, w1_oihw, w2_oihw, g1, b1, g2, b2):
    """NCHW in/out (PyTorch convention); lane-dense (N, H, W*C) inside the kernel."""
    N, C, H, W = x_nchw.shape
    WC = W * C
    inv_n = 1.0 / float(N * H * W)

    # NCHW -> lane-dense (N, H, W*C), channel fastest on the lane axis.
    x2 = jnp.transpose(x_nchw, (0, 2, 3, 1)).astype(jnp.float32).reshape(N, H, WC)

    def banded(w_oihw):
        # PyTorch (co, ci, kh, kw) -> (kh, kw, ci, co), then build per-kernel-row
        # banded matrices BW[kh, w_in*C+ci, w_out*C+co] = W[kh, w_in-w_out+1, ci, co].
        w = jnp.transpose(w_oihw, (2, 3, 1, 0)).astype(jnp.float32)
        d = jnp.arange(W)[:, None] - jnp.arange(W)[None, :] + 1   # kw = w_in - w_out + 1
        valid = (d >= 0) & (d <= 2)
        big = jnp.where(valid[None, :, :, None, None],
                        w[:, jnp.clip(d, 0, 2)], 0.0)             # (3, W, W, C, C)
        return jnp.transpose(big, (0, 1, 3, 2, 4)).reshape(3, WC, WC)

    bw1 = banded(w1_oihw)
    bw2 = banded(w2_oihw)

    # 0/1 matrix that both reduces lanes per channel and broadcasts the per-channel
    # result back to every lane of that channel:  M[i, j] = (i % C == j % C).
    lane = jnp.arange(WC)
    m_mat = (lane[:, None] % C == lane[None, :] % C).astype(jnp.float32)   # (WC, WC)

    def per_channel_lane(v):      # (C,) -> (1, WC) matching lane index w*C + c
        return jnp.tile(v.astype(jnp.float32), W).reshape(1, WC)

    g1l, b1l = per_channel_lane(g1), per_channel_lane(b1)
    g2l, b2l = per_channel_lane(g2), per_channel_lane(b2)

    def kernel(x_ref, bw1_ref, bw2_ref, m_ref,
               g1_ref, b1_ref, g2_ref, b2_ref, o_ref):
        x3 = x_ref[...]                                        # (N, H, WC)
        zrow = jnp.zeros((N, 1, WC), jnp.float32)

        def conv(y3, bw_ref):
            # 3x3 conv = 3 row-shifted lane-dense matmuls on the MXU.
            taps = (jnp.concatenate([zrow, y3[:, :H - 1, :]], axis=1),   # rows h-1 (zero at top)
                    y3,                                                   # rows h
                    jnp.concatenate([y3[:, 1:, :], zrow], axis=1))        # rows h+1 (zero at bottom)
            acc = jnp.zeros((N * H, WC), jnp.float32)
            for kh in range(3):
                acc = acc + jnp.dot(taps[kh].reshape(N * H, WC), bw_ref[kh],
                                    preferred_element_type=jnp.float32)
            return acc                                          # (N*H, WC), lane-dense

        def batch_norm(acc, g_ref, b_ref):
            # Fused one-pass training-mode BN: per-channel sum / sum-of-squares,
            # reduced + re-broadcast across lanes with a single 0/1 matmul.
            stats = jnp.concatenate(
                [jnp.sum(acc, axis=0, keepdims=True),
                 jnp.sum(acc * acc, axis=0, keepdims=True)], axis=0)      # (2, WC)
            ch = jnp.dot(stats, m_ref[...],
                         preferred_element_type=jnp.float32) * inv_n       # (2, WC)
            mean = ch[0:1, :]
            var = ch[1:2, :] - mean * mean                                 # biased variance
            scale = g_ref[...] * jax.lax.rsqrt(var + EPS)
            bias = b_ref[...] - mean * scale
            return acc * scale + bias

        y = jnp.maximum(batch_norm(conv(x3, bw1_ref), g1_ref, b1_ref), 0.0)
        y2 = batch_norm(conv(y.reshape(N, H, WC), bw2_ref), g2_ref, b2_ref)
        o_ref[...] = x3 + y2.reshape(N, H, WC)

    vmem = pl.BlockSpec(memory_space=pltpu.MemorySpace.VMEM)
    # BatchNorm needs full-batch statistics, so at these tiny shapes one program owns
    # the whole problem (grid would only add per-step overhead and split the BN reduce).
    # TODO(synk): for production shapes, tile over (N, H) with a 1-row halo + two-pass
    # BN stats and mark the independent axis "parallel" so v7x's two cores share work.
    out2 = pl.pallas_call(
        kernel,
        out_shape=jax.ShapeDtypeStruct((N, H, WC), jnp.float32),
        in_specs=[vmem] * 8,
        out_specs=vmem,
    )(x2, bw1, bw2, m_mat, g1l, b1l, g2l, b2l)

    return jnp.transpose(out2.reshape(N, H, W, C), (0, 3, 1, 2))   # back to NCHW


def resnet_block_ref(x, w1, w2, g1, b1, g2, b2):
    """Pure-JAX reference mirroring the PyTorch forward (training-mode BN), f32 HIGHEST."""
    def conv(z, w):
        return jax.lax.conv_general_dilated(
            z, w, window_strides=(1, 1), padding=((1, 1), (1, 1)),
            dimension_numbers=("NCHW", "OIHW", "NCHW"),
            precision=jax.lax.Precision.HIGHEST)

    def bn(z, g, b):
        mean = z.mean(axis=(0, 2, 3), keepdims=True)
        var = ((z - mean) ** 2).mean(axis=(0, 2, 3), keepdims=True)
        return ((z - mean) * jax.lax.rsqrt(var + EPS)
                * g.reshape(1, -1, 1, 1) + b.reshape(1, -1, 1, 1))

    y = jnp.maximum(bn(conv(x, w1), g1, b1), 0.0)
    y = bn(conv(y, w2), g2, b2)
    return x + y


if __name__ == "__main__":
    # batch=2, channels d=8, spatial 16x16  ->  x: [2, 8, 16, 16]  (W*C = 128 lanes)
    N, D, H, W = 2, 8, 16, 16
    key = jax.random.PRNGKey(0)
    kx, k1, k2, kg1, kb1, kg2, kb2 = jax.random.split(key, 7)

    x = jax.random.normal(kx, (N, D, H, W), dtype=jnp.float32)
    # conv weights in PyTorch (out, in, kh, kw) convention
    w1 = jax.random.normal(k1, (D, D, 3, 3), dtype=jnp.float32) * 0.1
    w2 = jax.random.normal(k2, (D, D, 3, 3), dtype=jnp.float32) * 0.1
    g1 = 1.0 + 0.1 * jax.random.normal(kg1, (D,), dtype=jnp.float32)
    b1 = 0.1 * jax.random.normal(kb1, (D,), dtype=jnp.float32)
    g2 = 1.0 + 0.1 * jax.random.normal(kg2, (D,), dtype=jnp.float32)
    b2 = 0.1 * jax.random.normal(kb2, (D,), dtype=jnp.float32)

    out = jax.block_until_ready(resnet_block(x, w1, w2, g1, b1, g2, b2))
    ref = jax.block_until_ready(resnet_block_ref(x, w1, w2, g1, b1, g2, b2))

    # Kernel matmuls use DEFAULT precision (single bf16 MXU pass, per perf feedback);
    # the reference is full-f32 HIGHEST, so compare with a bf16-appropriate tolerance.
    np.testing.assert_allclose(np.asarray(out), np.asarray(ref), rtol=2e-2, atol=2e-2)
    print("KERNEL_OK")
</pallas_src>

<mosaic_0001>
module attributes {stable_mosaic.version = 11 : i64} {
  func.func @kernel(%arg0: memref<2x16x128xf32, #tpu.memory_space<vmem>>, %arg1: memref<3x128x128xf32, #tpu.memory_space<vmem>>, %arg2: memref<3x128x128xf32, #tpu.memory_space<vmem>>, %arg3: memref<128x128xf32, #tpu.memory_space<vmem>>, %arg4: memref<1x128xf32, #tpu.memory_space<vmem>>, %arg5: memref<1x128xf32, #tpu.memory_space<vmem>>, %arg6: memref<1x128xf32, #tpu.memory_space<vmem>>, %arg7: memref<1x128xf32, #tpu.memory_space<vmem>>, %arg8: memref<2x16x128xf32, #tpu.memory_space<vmem>>) attributes {dimension_semantics = [], scalar_prefetch = 0 : i64, scratch_operands = 0 : i64, tpu.core_type = #tpu.core_type<tc>} {
    %c0 = arith.constant 0 : index
    %c0_0 = arith.constant 0 : index
    %c0_1 = arith.constant 0 : index
    %0 = vector.load %arg0[%c0, %c0_0, %c0_1] : memref<2x16x128xf32, #tpu.memory_space<vmem>>, vector<2x16x128xf32>
    %cst = arith.constant 0.000000e+00 : f32
    %1 = vector.broadcast %cst : f32 to vector<2x1x128xf32>
    %2 = vector.extract_strided_slice %0 {offsets = [0, 0, 0], sizes = [2, 15, 128], strides = [1, 1, 1]} : vector<2x16x128xf32> to vector<2x15x128xf32>
    %3 = tpu.concatenate %1, %2 in 1 : vector<2x1x128xf32>, vector<2x15x128xf32> -> vector<2x16x128xf32>
    %4 = vector.extract_strided_slice %0 {offsets = [0, 1, 0], sizes = [2, 15, 128], strides = [1, 1, 1]} : vector<2x16x128xf32> to vector<2x15x128xf32>
    %5 = tpu.concatenate %4, %1 in 1 : vector<2x15x128xf32>, vector<2x1x128xf32> -> vector<2x16x128xf32>
    %cst_2 = arith.constant 0.000000e+00 : f32
    %6 = vector.broadcast %cst_2 : f32 to vector<32x128xf32>
    %7 = vector.shape_cast %3 : vector<2x16x128xf32> to vector<32x128xf32>
    %c0_3 = arith.constant 0 : index
    %c0_4 = arith.constant 0 : index
    %c0_5 = arith.constant 0 : index
    %8 = vector.load %arg1[%c0_3, %c0_4, %c0_5] : memref<3x128x128xf32, #tpu.memory_space<vmem>>, vector<1x128x128xf32>
    %9 = vector.shape_cast %8 : vector<1x128x128xf32> to vector<128x128xf32>
    %cst_6 = arith.constant dense<0.000000e+00> : vector<32x128xf32>
    %10 = tpu.matmul %7, %9, %cst_6 {dimension_numbers = #tpu.dot_dimension_numbers<[1], [0], [0], [1], [0, 0, 1, 1], [], []>} : vector<32x128xf32>, vector<128x128xf32>, vector<32x128xf32> -> vector<32x128xf32>
    %11 = arith.addf %6, %10 : vector<32x128xf32>
    %12 = vector.shape_cast %0 : vector<2x16x128xf32> to vector<32x128xf32>
    %c1 = arith.constant 1 : index
    %c0_7 = arith.constant 0 : index
    %c0_8 = arith.constant 0 : index
    %13 = vector.load %arg1[%c1, %c0_7, %c0_8] : memref<3x128x128xf32, #tpu.memory_space<vmem>>, vector<1x128x128xf32>
    %14 = vector.shape_cast %13 : vector<1x128x128xf32> to vector<128x128xf32>
    %cst_9 = arith.constant dense<0.000000e+00> : vector<32x128xf32>
    %15 = tpu.matmul %12, %14, %cst_9 {dimension_numbers = #tpu.dot_dimension_numbers<[1], [0], [0], [1], [0, 0, 1, 1], [], []>} : vector<32x128xf32>, vector<128x128xf32>, vector<32x128xf32> -> vector<32x128xf32>
    %16 = arith.addf %11, %15 : vector<32x128xf32>
    %17 = vector.shape_cast %5 : vector<2x16x128xf32> to vector<32x128xf32>
    %c2 = arith.constant 2 : index
    %c0_10 = arith.constant 0 : index
    %c0_11 = arith.constant 0 : index
    %18 = vector.load %arg1[%c2, %c0_10, %c0_11] : memref<3x128x128xf32, #tpu.memory_space<vmem>>, vector<1x128x128xf32>
    %19 = vector.shape_cast %18 : vector<1x128x128xf32> to vector<128x128xf32>
    %cst_12 = arith.constant dense<0.000000e+00> : vector<32x128xf32>
    %20 = tpu.matmul %17, %19, %cst_12 {dimension_numbers = #tpu.dot_dimension_numbers<[1], [0], [0], [1], [0, 0, 1, 1], [], []>} : vector<32x128xf32>, vector<128x128xf32>, vector<32x128xf32> -> vector<32x128xf32>
    %21 = arith.addf %16, %20 : vector<32x128xf32>
    %cst_13 = arith.constant dense<0.000000e+00> : vector<128xf32>
    %22 = vector.multi_reduction <add>, %21, %cst_13 [0] : vector<32x128xf32> to vector<128xf32>
    %23 = vector.shape_cast %22 : vector<128xf32> to vector<1x128xf32>
    %24 = arith.mulf %21, %21 : vector<32x128xf32>
    %cst_14 = arith.constant dense<0.000000e+00> : vector<128xf32>
    %25 = vector.multi_reduction <add>, %24, %cst_14 [0] : vector<32x128xf32> to vector<128xf32>
    %26 = vector.shape_cast %25 : vector<128xf32> to vector<1x128xf32>
    %27 = tpu.concatenate %23, %26 in 0 : vector<1x128xf32>, vector<1x128xf32> -> vector<2x128xf32>
    %c0_15 = arith.constant 0 : index
    %c0_16 = arith.constant 0 : index
    %28 = vector.load %arg3[%c0_15, %c0_16] : memref<128x128xf32, #tpu.memory_space<vmem>>, vector<128x128xf32>
    %cst_17 = arith.constant dense<0.000000e+00> : vector<2x128xf32>
    %29 = tpu.matmul %27, %28, %cst_17 {dimension_numbers = #tpu.dot_dimension_numbers<[1], [0], [0], [1], [0, 0, 1, 1], [], []>} : vector<2x128xf32>, vector<128x128xf32>, vector<2x128xf32> -> vector<2x128xf32>
    %cst_18 = arith.constant 0.001953125 : f32
    %30 = vector.broadcast %cst_18 : f32 to vector<2x128xf32>
    %31 = arith.mulf %29, %30 : vector<2x128xf32>
    %32 = vector.extract_strided_slice %31 {offsets = [0, 0], sizes = [1, 128], strides = [1, 1]} : vector<2x128xf32> to vector<1x128xf32>
    %33 = vector.extract_strided_slice %31 {offsets = [1, 0], sizes = [1, 128], strides = [1, 1]} : vector<2x128xf32> to vector<1x128xf32>
    %34 = arith.mulf %32, %32 : vector<1x128xf32>
    %35 = arith.subf %33, %34 : vector<1x128xf32>
    %c0_19 = arith.constant 0 : index
    %c0_20 = arith.constant 0 : index
    %36 = vector.load %arg4[%c0_19, %c0_20] : memref<1x128xf32, #tpu.memory_space<vmem>>, vector<1x128xf32>
    %cst_21 = arith.constant 9.99999974E-6 : f32
    %37 = vector.broadcast %cst_21 : f32 to vector<1x128xf32>
    %38 = arith.addf %35, %37 : vector<1x128xf32>
    %39 = math.rsqrt %38 : vector<1x128xf32>
    %40 = arith.mulf %36, %39 : vector<1x128xf32>
    %c0_22 = arith.constant 0 : index
    %c0_23 = arith.constant 0 : index
    %41 = vector.load %arg5[%c0_22, %c0_23] : memref<1x128xf32, #tpu.memory_space<vmem>>, vector<1x128xf32>
    %42 = arith.mulf %32, %40 : vector<1x128xf32>
    %43 = arith.subf %41, %42 : vector<1x128xf32>
    %44 = vector.broadcast %40 : vector<1x128xf32> to vector<32x128xf32>
    %45 = arith.mulf %21, %44 : vector<32x128xf32>
    %46 = vector.broadcast %43 : vector<1x128xf32> to vector<32x128xf32>
    %47 = arith.addf %45, %46 : vector<32x128xf32>
    %cst_24 = arith.constant 0.000000e+00 : f32
    %48 = vector.broadcast %cst_24 : f32 to vector<32x128xf32>
    %49 = arith.maximumf %47, %48 : vector<32x128xf32>
    %50 = vector.shape_cast %49 : vector<32x128xf32> to vector<2x16x128xf32>
    %51 = vector.extract_strided_slice %50 {offsets = [0, 0, 0], sizes = [2, 15, 128], strides = [1, 1, 1]} : vector<2x16x128xf32> to vector<2x15x128xf32>
    %52 = tpu.concatenate %1, %51 in 1 : vector<2x1x128xf32>, vector<2x15x128xf32> -> vector<2x16x128xf32>
    %53 = vector.extract_strided_slice %50 {offsets = [0, 1, 0], sizes = [2, 15, 128], strides = [1, 1, 1]} : vector<2x16x128xf32> to vector<2x15x128xf32>
    %54 = tpu.concatenate %53, %1 in 1 : vector<2x15x128xf32>, vector<2x1x128xf32> -> vector<2x16x128xf32>
    %cst_25 = arith.constant 0.000000e+00 : f32
    %55 = vector.broadcast %cst_25 : f32 to vector<32x128xf32>
    %56 = vector.shape_cast %52 : vector<2x16x128xf32> to vector<32x128xf32>
    %c0_26 = arith.constant 0 : index
    %c0_27 = arith.constant 0 : index
    %c0_28 = arith.constant 0 : index
    %57 = vector.load %arg2[%c0_26, %c0_27, %c0_28] : memref<3x128x128xf32, #tpu.memory_space<vmem>>, vector<1x128x128xf32>
    %58 = vector.shape_cast %57 : vector<1x128x128xf32> to vector<128x128xf32>
    %cst_29 = arith.constant dense<0.000000e+00> : vector<32x128xf32>
    %59 = tpu.matmul %56, %58, %cst_29 {dimension_numbers = #tpu.dot_dimension_numbers<[1], [0], [0], [1], [0, 0, 1, 1], [], []>} : vector<32x128xf32>, vector<128x128xf32>, vector<32x128xf32> -> vector<32x128xf32>
    %60 = arith.addf %55, %59 : vector<32x128xf32>
    %61 = vector.shape_cast %50 : vector<2x16x128xf32> to vector<32x128xf32>
    %c1_30 = arith.constant 1 : index
    %c0_31 = arith.constant 0 : index
    %c0_32 = arith.constant 0 : index
    %62 = vector.load %arg2[%c1_30, %c0_31, %c0_32] : memref<3x128x128xf32, #tpu.memory_space<vmem>>, vector<1x128x128xf32>
    %63 = vector.shape_cast %62 : vector<1x128x128xf32> to vector<128x128xf32>
    %cst_33 = arith.constant dense<0.000000e+00> : vector<32x128xf32>
    %64 = tpu.matmul %61, %63, %cst_33 {dimension_numbers = #tpu.dot_dimension_numbers<[1], [0], [0], [1], [0, 0, 1, 1], [], []>} : vector<32x128xf32>, vector<128x128xf32>, vector<32x128xf32> -> vector<32x128xf32>
    %65 = arith.addf %60, %64 : vector<32x128xf32>
    %66 = vector.shape_cast %54 : vector<2x16x128xf32> to vector<32x128xf32>
    %c2_34 = arith.constant 2 : index
    %c0_35 = arith.constant 0 : index
    %c0_36 = arith.constant 0 : index
    %67 = vector.load %arg2[%c2_34, %c0_35, %c0_36] : memref<3x128x128xf32, #tpu.memory_space<vmem>>, vector<1x128x128xf32>
    %68 = vector.shape_cast %67 : vector<1x128x128xf32> to vector<128x128xf32>
    %cst_37 = arith.constant dense<0.000000e+00> : vector<32x128xf32>
    %69 = tpu.matmul %66, %68, %cst_37 {dimension_numbers = #tpu.dot_dimension_numbers<[1], [0], [0], [1], [0, 0, 1, 1], [], []>} : vector<32x128xf32>, vector<128x128xf32>, vector<32x128xf32> -> vector<32x128xf32>
    %70 = arith.addf %65, %69 : vector<32x128xf32>
    %cst_38 = arith.constant dense<0.000000e+00> : vector<128xf32>
    %71 = vector.multi_reduction <add>, %70, %cst_38 [0] : vector<32x128xf32> to vector<128xf32>
    %72 = vector.shape_cast %71 : vector<128xf32> to vector<1x128xf32>
    %73 = arith.mulf %70, %70 : vector<32x128xf32>
    %cst_39 = arith.constant dense<0.000000e+00> : vector<128xf32>
    %74 = vector.multi_reduction <add>, %73, %cst_39 [0] : vector<32x128xf32> to vector<128xf32>
    %75 = vector.shape_cast %74 : vector<128xf32> to vector<1x128xf32>
    %76 = tpu.concatenate %72, %75 in 0 : vector<1x128xf32>, vector<1x128xf32> -> vector<2x128xf32>
    %c0_40 = arith.constant 0 : index
    %c0_41 = arith.constant 0 : index
    %77 = vector.load %arg3[%c0_40, %c0_41] : memref<128x128xf32, #tpu.memory_space<vmem>>, vector<128x128xf32>
    %cst_42 = arith.constant dense<0.000000e+00> : vector<2x128xf32>
    %78 = tpu.matmul %76, %77, %cst_42 {dimension_numbers = #tpu.dot_dimension_numbers<[1], [0], [0], [1], [0, 0, 1, 1], [], []>} : vector<2x128xf32>, vector<128x128xf32>, vector<2x128xf32> -> vector<2x128xf32>
    %cst_43 = arith.constant 0.001953125 : f32
    %79 = vector.broadcast %cst_43 : f32 to vector<2x128xf32>
    %80 = arith.mulf %78, %79 : vector<2x128xf32>
    %81 = vector.extract_strided_slice %80 {offsets = [0, 0], sizes = [1, 128], strides = [1, 1]} : vector<2x128xf32> to vector<1x128xf32>
    %82 = vector.extract_strided_slice %80 {offsets = [1, 0], sizes = [1, 128], strides = [1, 1]} : vector<2x128xf32> to vector<1x128xf32>
    %83 = arith.mulf %81, %81 : vector<1x128xf32>
    %84 = arith.subf %82, %83 : vector<1x128xf32>
    %c0_44 = arith.constant 0 : index
    %c0_45 = arith.constant 0 : index
    %85 = vector.load %arg6[%c0_44, %c0_45] : memref<1x128xf32, #tpu.memory_space<vmem>>, vector<1x128xf32>
    %cst_46 = arith.constant 9.99999974E-6 : f32
    %86 = vector.broadcast %cst_46 : f32 to vector<1x128xf32>
    %87 = arith.addf %84, %86 : vector<1x128xf32>
    %88 = math.rsqrt %87 : vector<1x128xf32>
    %89 = arith.mulf %85, %88 : vector<1x128xf32>
    %c0_47 = arith.constant 0 : index
    %c0_48 = arith.constant 0 : index
    %90 = vector.load %arg7[%c0_47, %c0_48] : memref<1x128xf32, #tpu.memory_space<vmem>>, vector<1x128xf32>
    %91 = arith.mulf %81, %89 : vector<1x128xf32>
    %92 = arith.subf %90, %91 : vector<1x128xf32>
    %93 = vector.broadcast %89 : vector<1x128xf32> to vector<32x128xf32>
    %94 = arith.mulf %70, %93 : vector<32x128xf32>
    %95 = vector.broadcast %92 : vector<1x128xf32> to vector<32x128xf32>
    %96 = arith.addf %94, %95 : vector<32x128xf32>
    %97 = vector.shape_cast %96 : vector<32x128xf32> to vector<2x16x128xf32>
    %98 = arith.addf %0, %97 : vector<2x16x128xf32>
    %c0_49 = arith.constant 0 : index
    %c0_50 = arith.constant 0 : index
    %c0_51 = arith.constant 0 : index
    %99 = vector.load %arg8[%c0_49, %c0_50, %c0_51] : memref<2x16x128xf32, #tpu.memory_space<vmem>>, vector<2x16x128xf32>
    tpu.vector_store %arg8[%c0_49, %c0_50, %c0_51], %98 {strides = array<i32>} : memref<2x16x128xf32, #tpu.memory_space<vmem>>, vector<2x16x128xf32>,
    return
  }
}

</mosaic_0001>

<llo_original>
// kernel: tpu_custom_call.1
$region0: #{tpu_custom_call.1}
  #allocation0 [shape = 'u32[]', space=smem, size = 0x4, offset = 0x4, fixed_abs, tag = 'smem constant byte address 0x4 - core index']
  #allocation1 [shape = 'u32[144,128]{1,0:T(1,128)}', space=vmem, size = 0x12000, scoped, tag = 'internal scratch']
  %s0 = inlined_call_operand.hbm [shape: f32[2,16,128], index: 0, kind: input, shape index: {}]
  %s1 = inlined_call_operand.hbm [shape: f32[3,128,128], index: 1, kind: input, shape index: {}]
  %s2 = inlined_call_operand.hbm [shape: f32[3,128,128], index: 2, kind: input, shape index: {}]
  %s3 = inlined_call_operand.hbm [shape: f32[128,128], index: 3, kind: input, shape index: {}]
  %s4 = inlined_call_operand.vmem [shape: f32[1,128], index: 4, kind: input, shape index: {}]
  %s5 = inlined_call_operand.vmem [shape: f32[1,128], index: 5, kind: input, shape index: {}]
  %s6 = inlined_call_operand.vmem [shape: f32[1,128], index: 6, kind: input, shape index: {}]
  %s7 = inlined_call_operand.vmem [shape: f32[1,128], index: 7, kind: input, shape index: {}]
  %s8 = inlined_call_operand.hbm [shape: f32[2,16,128], index: 8, kind: output, shape index: {}]
  %s9 = sld [smem:[#allocation0]]
  $region58: #{tpu_custom_call.1} parent=0
    _
  %s11 = ssub.s32 1, %s9
  %s12 = scalar_select 0, %s11, %s9
  $region1: #{tpu_custom_call.1} parent=0
    #allocation2 [shape = 'u8[16384]{0}', space=vmem, size = 0x4000, scoped, tag = 'input window, operand 0, single buffered']
    #allocation3 [shape = 's32[1]{0}', space=sflag, size = 0x4, scoped, tag = 'scoped memory for tpu_custom_call.1']
    #allocation4 [shape = 's32[1]{0}', space=sflag, size = 0x4, scoped, tag = 'scoped memory for tpu_custom_call.1']
    #allocation5 [shape = 'u8[196608]{0}', space=vmem, size = 0x30000, scoped, tag = 'input window, operand 1, single buffered']
    #allocation6 [shape = 's32[1]{0}', space=sflag, size = 0x4, scoped, tag = 'scoped memory for tpu_custom_call.1']
    #allocation7 [shape = 'u8[196608]{0}', space=vmem, size = 0x30000, scoped, tag = 'input window, operand 2, single buffered']
    #allocation8 [shape = 'u8[65536]{0}', space=vmem, size = 0x10000, scoped, tag = 'input window, operand 3, single buffered']
    #allocation9 [shape = 's32[1]{0}', space=sflag, size = 0x4, scoped, tag = 'scoped memory for tpu_custom_call.1']
    #allocation10 [shape = 'u8[16384]{0}', space=vmem, size = 0x4000, scoped, tag = 'output window, operand 0, single buffered']
    %13 = vsyncpa [#allocation3], 0
    %14 = vsyncpa [#allocation6], 0
    %15 = vsyncpa [#allocation9], 0
    %16 = vsyncpa [#allocation4], 0
    // Predicated region
    $region2: #{tpu_custom_call.1} parent=1 // pred_check
      _
    $region3: #{tpu_custom_call.1} parent=1 // pred_check_branch
      %18 = sbr.rel (0) target = $region5
    $region4: #{tpu_custom_call.1} parent=1 // pred_region
      %s20 = ssub.s32 512, 512
      %21 = vsyncadd [#allocation3], %s20
      %s22 = sshll.u32 [#allocation2], 4
      %s23 = int_to_ptr.vmem [resolvable:$true] %s22
      %28 = dma.hbm_to_vmem [thread:$0]  %s0, 512, %s23, [#allocation3], 128, 128, 8
    $region5: #{tpu_custom_call.1} parent=1 // pred_fallthru
      _
    // Predicated region
    $region6: #{tpu_custom_call.1} parent=1 // pred_check
      _
    $region7: #{tpu_custom_call.1} parent=1 // pred_check_branch
      %30 = sbr.rel (0) target = $region9
    $region8: #{tpu_custom_call.1} parent=1 // pred_region
      %s32 = ssub.s32 6144, 6144
      %33 = vsyncadd [#allocation6], %s32
      %s34 = sshll.u32 [#allocation5], 4
      %s35 = int_to_ptr.vmem [resolvable:$true] %s34
      %40 = dma.hbm_to_vmem [thread:$0]  %s1, 6144, %s35, [#allocation6], 128, 128, 8
    $region9: #{tpu_custom_call.1} parent=1 // pred_fallthru
      _
    // Predicated region
    $region10: #{tpu_custom_call.1} parent=1 // pred_check
      _
    $region11: #{tpu_custom_call.1} parent=1 // pred_check_branch
      %42 = sbr.rel (0) target = $region13
    $region12: #{tpu_custom_call.1} parent=1 // pred_region
      %s44 = ssub.s32 6144, 6144
      %45 = vsyncadd [#allocation6], %s44
      %s46 = sshll.u32 [#allocation7], 4
      %s47 = int_to_ptr.vmem [resolvable:$true] %s46
      %52 = dma.hbm_to_vmem [thread:$0]  %s2, 6144, %s47, [#allocation6], 128, 128, 8
    $region13: #{tpu_custom_call.1} parent=1 // pred_fallthru
      _
    // Predicated region
    $region14: #{tpu_custom_call.1} parent=1 // pred_check
      _
    $region15: #{tpu_custom_call.1} parent=1 // pred_check_branch
      %54 = sbr.rel (0) target = $region17
    $region16: #{tpu_custom_call.1} parent=1 // pred_region
      %s56 = ssub.s32 2048, 2048
      %57 = vsyncadd [#allocation9], %s56
      %s58 = sshll.u32 [#allocation8], 4
      %s59 = int_to_ptr.vmem [resolvable:$true] %s58
      %64 = dma.hbm_to_vmem [thread:$0]  %s3, 2048, %s59, [#allocation9], 128, 128, 8
    $region17: #{tpu_custom_call.1} parent=1 // pred_fallthru
      _
    // Predicated region
    $region18: #{tpu_custom_call.1} parent=1 // pred_check
      _
    $region19: #{tpu_custom_call.1} parent=1 // pred_check_branch
      %66 = sbr.rel (0) target = $region21
    $region20: #{tpu_custom_call.1} parent=1 // pred_region
      _
    $region21: #{tpu_custom_call.1} parent=1 // pred_fallthru
      _
    // Predicated region
    $region22: #{tpu_custom_call.1} parent=1 // pred_check
      _
    $region23: #{tpu_custom_call.1} parent=1 // pred_check_branch
      %68 = sbr.rel (0) target = $region25
    $region24: #{tpu_custom_call.1} parent=1 // pred_region
      _
    $region25: #{tpu_custom_call.1} parent=1 // pred_fallthru
      _
    // Predicated region
    $region26: #{tpu_custom_call.1} parent=1 // pred_check
      _
    $region27: #{tpu_custom_call.1} parent=1 // pred_check_branch
      %70 = sbr.rel (0) target = $region29
    $region28: #{tpu_custom_call.1} parent=1 // pred_region
      _
    $region29: #{tpu_custom_call.1} parent=1 // pred_fallthru
      _
    // Predicated region
    $region30: #{tpu_custom_call.1} parent=1 // pred_check
      _
    $region31: #{tpu_custom_call.1} parent=1 // pred_check_branch
      %72 = sbr.rel (0) target = $region33
    $region32: #{tpu_custom_call.1} parent=1 // pred_region
      _
    $region33: #{tpu_custom_call.1} parent=1 // pred_fallthru
      _
    // Predicated region
    $region34: #{tpu_custom_call.1} parent=1 // pred_check
      _
    $region35: #{tpu_custom_call.1} parent=1 // pred_check_branch
      %74 = sbr.rel (0) target = $region37
    $region36: #{tpu_custom_call.1} parent=1 // pred_region
      %75 = dma.done [#allocation3], 512
    $region37: #{tpu_custom_call.1} parent=1 // pred_fallthru
      _
    // Predicated region
    $region38: #{tpu_custom_call.1} parent=1 // pred_check
      _
    $region39: #{tpu_custom_call.1} parent=1 // pred_check_branch
      %77 = sbr.rel (0) target = $region41
    $region40: #{tpu_custom_call.1} parent=1 // pred_region
      %78 = dma.done [#allocation6], 6144
    $region41: #{tpu_custom_call.1} parent=1 // pred_fallthru
      _
    // Predicated region
    $region42: #{tpu_custom_call.1} parent=1 // pred_check
      _
    $region43: #{tpu_custom_call.1} parent=1 // pred_check_branch
      %80 = sbr.rel (0) target = $region45
    $region44: #{tpu_custom_call.1} parent=1 // pred_region
      %81 = dma.done [#allocation6], 6144
    $region45: #{tpu_custom_call.1} parent=1 // pred_fallthru
      _
    // Predicated region
    $region46: #{tpu_custom_call.1} parent=1 // pred_check
      _
    $region47: #{tpu_custom_call.1} parent=1 // pred_check_branch
      %83 = sbr.rel (0) target = $region49
    $region48: #{tpu_custom_call.1} parent=1 // pred_region
      %84 = dma.done [#allocation9], 2048
    $region49: #{tpu_custom_call.1} parent=1 // pred_fallthru
      _
    %v85 = vld [vmem:[#allocation2] sm:$0xff]
    %v86 = vld [vmem:[#allocation2 + $0x8] sm:$0xff]
    %v87 = vld [vmem:[#allocation2 + $0x10] sm:$0xff]
    %v88 = vld [vmem:[#allocation2 + $0x18] sm:$0xff]
    %vm93 = vcmask 1040384
    %v94 = vrot.slane %v85, 7
    %v95 = vrot.slane %v86, 7
    %v96 = vsel %vm93, %v94, %v95
    %v97 = vrot.slane %v87, 7
    %v98 = vrot.slane %v88, 7
    %v99 = vsel %vm93, %v97, %v98
    %v104 = vsel %vm93, 0.0, %v94
    %v105 = vsel %vm93, 0.0, %v97
    %vm106 = vcmask 1046528
    %v107 = vrot.slane %v85, 1
    %v108 = vrot.slane %v86, 1
    %v109 = vsel %vm106, %v107, %v108
    %v110 = vrot.slane %v87, 1
    %v111 = vrot.slane %v88, 1
    %v112 = vsel %vm106, %v110, %v111
    %v117 = vsel %vm106, %v108, 0.0
    %v118 = vsel %vm106, %v111, 0.0
    %v119 = vld [vmem:[#allocation5] sm:$0xff]
    %v120 = vld [vmem:[#allocation5 + $0x8] sm:$0xff]
    %v121 = vld [vmem:[#allocation5 + $0x10] sm:$0xff]
    %v122 = vld [vmem:[#allocation5 + $0x18] sm:$0xff]
    %v123 = vld [vmem:[#allocation5 + $0x20] sm:$0xff]
    %v124 = vld [vmem:[#allocation5 + $0x28] sm:$0xff]
    %v125 = vld [vmem:[#allocation5 + $0x30] sm:$0xff]
    %v126 = vld [vmem:[#allocation5 + $0x38] sm:$0xff]
    %v127 = vld [vmem:[#allocation5 + $0x40] sm:$0xff]
    %v128 = vld [vmem:[#allocation5 + $0x48] sm:$0xff]
    %v129 = vld [vmem:[#allocation5 + $0x50] sm:$0xff]
    %v130 = vld [vmem:[#allocation5 + $0x58] sm:$0xff]
    %v131 = vld [vmem:[#allocation5 + $0x60] sm:$0xff]
    %v132 = vld [vmem:[#allocation5 + $0x68] sm:$0xff]
    %v133 = vld [vmem:[#allocation5 + $0x70] sm:$0xff]
    %v134 = vld [vmem:[#allocation5 + $0x78] sm:$0xff]
    %s135 = scalar_lea.vmem [#allocation5], 128
    %v136 = vld [vmem:[%s135] sm:$0xff]
    %v137 = vld [vmem:[%s135 + $0x8] sm:$0xff]
    %v138 = vld [vmem:[%s135 + $0x10] sm:$0xff]
    %v139 = vld [vmem:[%s135 + $0x18] sm:$0xff]
    %v140 = vld [vmem:[%s135 + $0x20] sm:$0xff]
    %v141 = vld [vmem:[%s135 + $0x28] sm:$0xff]
    %v142 = vld [vmem:[%s135 + $0x30] sm:$0xff]
    %v143 = vld [vmem:[%s135 + $0x38] sm:$0xff]
    %v144 = vld [vmem:[%s135 + $0x40] sm:$0xff]
    %v145 = vld [vmem:[%s135 + $0x48] sm:$0xff]
    %v146 = vld [vmem:[%s135 + $0x50] sm:$0xff]
    %v147 = vld [vmem:[%s135 + $0x58] sm:$0xff]
    %v148 = vld [vmem:[%s135 + $0x60] sm:$0xff]
    %v149 = vld [vmem:[%s135 + $0x68] sm:$0xff]
    %v150 = vld [vmem:[%s135 + $0x70] sm:$0xff]
    %v151 = vld [vmem:[%s135 + $0x78] sm:$0xff]
    %152 = vmatprep.subr.mxu0 0.0
    %153 = vmatpush1.msra.mxu0 %v136
    %154 = vmatprep.subr.mxu0 0.0
    %155 = vmatpush1.msra.mxu0 %v137
    %156 = vmatprep.subr.mxu0 0.0
    %157 = vmatpush1.msra.mxu0 %v138
    %158 = vmatprep.subr.mxu0 0.0
    %159 = vmatpush1.msra.mxu0 %v139
    %160 = vmatprep.subr.mxu0 0.0
    %161 = vmatpush1.msra.mxu0 %v140
    %162 = vmatprep.subr.mxu0 0.0
    %163 = vmatpush1.msra.mxu0 %v141
    %164 = vmatprep.subr.mxu0 0.0
    %165 = vmatpush1.msra.mxu0 %v142
    %166 = vmatprep.subr.mxu0 0.0
    %167 = vmatpush1.msra.mxu0 %v143
    %168 = vmatprep.subr.mxu0 0.0
    %169 = vmatpush1.msra.mxu0 %v144
    %170 = vmatprep.subr.mxu0 0.0
    %171 = vmatpush1.msra.mxu0 %v145
    %172 = vmatprep.subr.mxu0 0.0
    %173 = vmatpush1.msra.mxu0 %v146
    %174 = vmatprep.subr.mxu0 0.0
    %175 = vmatpush1.msra.mxu0 %v147
    %176 = vmatprep.subr.mxu0 0.0
    %177 = vmatpush1.msra.mxu0 %v148
    %178 = vmatprep.subr.mxu0 0.0
    %179 = vmatpush1.msra.mxu0 %v149
    %180 = vmatprep.subr.mxu0 0.0
    %181 = vmatpush1.msra.mxu0 %v150
    %182 = vmatprep.subr.mxu0 0.0
    %183 = vmatpush1.msra.mxu0 %v151
    %184 = vmatprep.subr.mxu0 0.0
    %185 = vmatpush1.msra.mxu0 0.0
    %186 = vmatprep.subr.mxu0 0.0
    %187 = vmatpush1.msra.mxu0 0.0
    %188 = vmatprep.subr.mxu0 0.0
    %189 = vmatpush1.msra.mxu0 0.0
    %190 = vmatprep.subr.mxu0 0.0
    %191 = vmatpush1.msra.mxu0 0.0
    %192 = vmatprep.subr.mxu0 0.0
    %193 = vmatpush1.msra.mxu0 0.0
    %194 = vmatprep.subr.mxu0 0.0
    %195 = vmatpush1.msra.mxu0 0.0
    %196 = vmatprep.subr.mxu0 0.0
    %197 = vmatpush1.msra.mxu0 0.0
    %198 = vmatprep.subr.mxu0 0.0
    %199 = vmatpush1.msra.mxu0 0.0
    %200 = vmatprep.subr.mxu0 0.0
    %201 = vmatpush1.msra.mxu0 0.0
    %202 = vmatprep.subr.mxu0 0.0
    %203 = vmatpush1.msra.mxu0 0.0
    %204 = vmatprep.subr.mxu0 0.0
    %205 = vmatpush1.msra.mxu0 0.0
    %206 = vmatprep.subr.mxu0 0.0
    %207 = vmatpush1.msra.mxu0 0.0
    %208 = vmatprep.subr.mxu0 0.0
    %209 = vmatpush1.msra.mxu0 0.0
    %210 = vmatprep.subr.mxu0 0.0
    %211 = vmatpush1.msra.mxu0 0.0
    %212 = vmatprep.subr.mxu0 0.0
    %213 = vmatpush1.msra.mxu0 0.0
    %214 = vmatprep.subr.mxu0 0.0
    %215 = vmatpush1.msra.mxu0 0.0
    %216 = vmatprep.mubr.f32.mxu0 0.0
    %217 = vmatmul.mubr.f32.gmra.mrb[0].mxu0 %v85
    %v218 = vpop.f32.mrb[0].mxu0
    %v219 = vadd.f32 0.0, %v218
    %v220 = vpop.f32.mrb[0].mxu0
    %221 = vmatprep.mubr.f32.mxu0 0.0
    %222 = vmatmul.mubr.f32.gmra.mrb[0].mxu0 %v86
    %v223 = vpop.f32.mrb[0].mxu0
    %v224 = vadd.f32 0.0, %v223
    %v225 = vpop.f32.mrb[0].mxu0
    %226 = vmatprep.mubr.f32.mxu0 0.0
    %227 = vmatmul.mubr.f32.gmra.mrb[0].mxu0 %v87
    %v228 = vpop.f32.mrb[0].mxu0
    %v229 = vadd.f32 0.0, %v228
    %v230 = vpop.f32.mrb[0].mxu0
    %231 = vmatprep.mubr.f32.mxu0 0.0
    %232 = vmatmul.mubr.f32.gmra.mrb[0].mxu0 %v88
    %v233 = vpop.f32.mrb[0].mxu0
    %v234 = vadd.f32 0.0, %v233
    %v235 = vpop.f32.mrb[0].mxu0
    %236 = vdwg.mxu0
    %237 = vmatprep.subr.mxu0 0.0
    %238 = vmatpush1.msra.mxu0 %v119
    %239 = vmatprep.subr.mxu0 0.0
    %240 = vmatpush1.msra.mxu0 %v120
    %241 = vmatprep.subr.mxu0 0.0
    %242 = vmatpush1.msra.mxu0 %v121
    %243 = vmatprep.subr.mxu0 0.0
    %244 = vmatpush1.msra.mxu0 %v122
    %245 = vmatprep.subr.mxu0 0.0
    %246 = vmatpush1.msra.mxu0 %v123
    %247 = vmatprep.subr.mxu0 0.0
    %248 = vmatpush1.msra.mxu0 %v124
    %249 = vmatprep.subr.mxu0 0.0
    %250 = vmatpush1.msra.mxu0 %v125
    %251 = vmatprep.subr.mxu0 0.0
    %252 = vmatpush1.msra.mxu0 %v126
    %253 = vmatprep.subr.mxu0 0.0
    %254 = vmatpush1.msra.mxu0 %v127
    %255 = vmatprep.subr.mxu0 0.0
    %256 = vmatpush1.msra.mxu0 %v128
    %257 = vmatprep.subr.mxu0 0.0
    %258 = vmatpush1.msra.mxu0 %v129
    %259 = vmatprep.subr.mxu0 0.0
    %260 = vmatpush1.msra.mxu0 %v130
    %261 = vmatprep.subr.mxu0 0.0
    %262 = vmatpush1.msra.mxu0 %v131
    %263 = vmatprep.subr.mxu0 0.0
    %264 = vmatpush1.msra.mxu0 %v132
    %265 = vmatprep.subr.mxu0 0.0
    %266 = vmatpush1.msra.mxu0 %v133
    %267 = vmatprep.subr.mxu0 0.0
    %268 = vmatpush1.msra.mxu0 %v134
    %269 = vmatprep.subr.mxu0 0.0
    %270 = vmatpush1.msra.mxu0 0.0
    %271 = vmatprep.subr.mxu0 0.0
    %272 = vmatpush1.msra.mxu0 0.0
    %273 = vmatprep.subr.mxu0 0.0
    %274 = vmatpush1.msra.mxu0 0.0
    %275 = vmatprep.subr.mxu0 0.0
    %276 = vmatpush1.msra.mxu0 0.0
    %277 = vmatprep.subr.mxu0 0.0
    %278 = vmatpush1.msra.mxu0 0.0
    %279 = vmatprep.subr.mxu0 0.0
    %280 = vmatpush1.msra.mxu0 0.0
    %281 = vmatprep.subr.mxu0 0.0
    %282 = vmatpush1.msra.mxu0 0.0
    %283 = vmatprep.subr.mxu0 0.0
    %284 = vmatpush1.msra.mxu0 0.0
    %285 = vmatprep.subr.mxu0 0.0
    %286 = vmatpush1.msra.mxu0 0.0
    %287 = vmatprep.subr.mxu0 0.0
    %288 = vmatpush1.msra.mxu0 0.0
    %289 = vmatprep.subr.mxu0 0.0
    %290 = vmatpush1.msra.mxu0 0.0
    %291 = vmatprep.subr.mxu0 0.0
    %292 = vmatpush1.msra.mxu0 0.0
    %293 = vmatprep.subr.mxu0 0.0
    %294 = vmatpush1.msra.mxu0 0.0
    %295 = vmatprep.subr.mxu0 0.0
    %296 = vmatpush1.msra.mxu0 0.0
    %297 = vmatprep.subr.mxu0 0.0
    %298 = vmatpush1.msra.mxu0 0.0
    %299 = vmatprep.subr.mxu0 0.0
    %300 = vmatpush1.msra.mxu0 0.0
    %301 = vmatprep.mubr.f32.mxu0 0.0
    %302 = vmatmul.mubr.f32.gmra.mrb[0].mxu0 %v104
    %v303 = vpop.f32.mrb[0].mxu0
    %v304 = vadd.f32 %v219, %v303
    %v305 = vpop.f32.mrb[0].mxu0
    %306 = vmatprep.mubr.f32.mxu0 0.0
    %307 = vmatmul.mubr.f32.gmra.mrb[0].mxu0 %v96
    %v308 = vpop.f32.mrb[0].mxu0
    %v309 = vadd.f32 %v224, %v308
    %v310 = vpop.f32.mrb[0].mxu0
    %311 = vmatprep.mubr.f32.mxu0 0.0
    %312 = vmatmul.mubr.f32.gmra.mrb[0].mxu0 %v105
    %v313 = vpop.f32.mrb[0].mxu0
    %v314 = vadd.f32 %v229, %v313
    %v315 = vpop.f32.mrb[0].mxu0
    %316 = vmatprep.mubr.f32.mxu0 0.0
    %317 = vmatmul.mubr.f32.gmra.mrb[0].mxu0 %v99
    %v318 = vpop.f32.mrb[0].mxu0
    %v319 = vadd.f32 %v234, %v318
    %v320 = vpop.f32.mrb[0].mxu0
    %321 = vdwg.mxu0
    %s322 = scalar_lea.vmem [#allocation5], 256
    %v323 = vld [vmem:[%s322] sm:$0xff]
    %v324 = vld [vmem:[%s322 + $0x8] sm:$0xff]
    %v325 = vld [vmem:[%s322 + $0x10] sm:$0xff]
    %v326 = vld [vmem:[%s322 + $0x18] sm:$0xff]
    %v327 = vld [vmem:[%s322 + $0x20] sm:$0xff]
    %v328 = vld [vmem:[%s322 + $0x28] sm:$0xff]
    %v329 = vld [vmem:[%s322 + $0x30] sm:$0xff]
    %v330 = vld [vmem:[%s322 + $0x38] sm:$0xff]
    %v331 = vld [vmem:[%s322 + $0x40] sm:$0xff]
    %v332 = vld [vmem:[%s322 + $0x48] sm:$0xff]
    %v333 = vld [vmem:[%s322 + $0x50] sm:$0xff]
    %v334 = vld [vmem:[%s322 + $0x58] sm:$0xff]
    %v335 = vld [vmem:[%s322 + $0x60] sm:$0xff]
    %v336 = vld [vmem:[%s322 + $0x68] sm:$0xff]
    %v337 = vld [vmem:[%s322 + $0x70] sm:$0xff]
    %v338 = vld [vmem:[%s322 + $0x78] sm:$0xff]
    %339 = vmatprep.subr.mxu0 0.0
    %340 = vmatpush1.msra.mxu0 %v323
    %341 = vmatprep.subr.mxu0 0.0
    %342 = vmatpush1.msra.mxu0 %v324
    %343 = vmatprep.subr.mxu0 0.0
    %344 = vmatpush1.msra.mxu0 %v325
    %345 = vmatprep.subr.mxu0 0.0
    %346 = vmatpush1.msra.mxu0 %v326
    %347 = vmatprep.subr.mxu0 0.0
    %348 = vmatpush1.msra.mxu0 %v327
    %349 = vmatprep.subr.mxu0 0.0
    %350 = vmatpush1.msra.mxu0 %v328
    %351 = vmatprep.subr.mxu0 0.0
    %352 = vmatpush1.msra.mxu0 %v329
    %353 = vmatprep.subr.mxu0 0.0
    %354 = vmatpush1.msra.mxu0 %v330
    %355 = vmatprep.subr.mxu0 0.0
    %356 = vmatpush1.msra.mxu0 %v331
    %357 = vmatprep.subr.mxu0 0.0
    %358 = vmatpush1.msra.mxu0 %v332
    %359 = vmatprep.subr.mxu0 0.0
    %360 = vmatpush1.msra.mxu0 %v333
    %361 = vmatprep.subr.mxu0 0.0
    %362 = vmatpush1.msra.mxu0 %v334
    %363 = vmatprep.subr.mxu0 0.0
    %364 = vmatpush1.msra.mxu0 %v335
    %365 = vmatprep.subr.mxu0 0.0
    %366 = vmatpush1.msra.mxu0 %v336
    %367 = vmatprep.subr.mxu0 0.0
    %368 = vmatpush1.msra.mxu0 %v337
    %369 = vmatprep.subr.mxu0 0.0
    %370 = vmatpush1.msra.mxu0 %v338
    %371 = vmatprep.subr.mxu0 0.0
    %372 = vmatpush1.msra.mxu0 0.0
    %373 = vmatprep.subr.mxu0 0.0
    %374 = vmatpush1.msra.mxu0 0.0
    %375 = vmatprep.subr.mxu0 0.0
    %376 = vmatpush1.msra.mxu0 0.0
    %377 = vmatprep.subr.mxu0 0.0
    %378 = vmatpush1.msra.mxu0 0.0
    %379 = vmatprep.subr.mxu0 0.0
    %380 = vmatpush1.msra.mxu0 0.0
    %381 = vmatprep.subr.mxu0 0.0
    %382 = vmatpush1.msra.mxu0 0.0
    %383 = vmatprep.subr.mxu0 0.0
    %384 = vmatpush1.msra.mxu0 0.0
    %385 = vmatprep.subr.mxu0 0.0
    %386 = vmatpush1.msra.mxu0 0.0
    %387 = vmatprep.subr.mxu0 0.0
    %388 = vmatpush1.msra.mxu0 0.0
    %389 = vmatprep.subr.mxu0 0.0
    %390 = vmatpush1.msra.mxu0 0.0
    %391 = vmatprep.subr.mxu0 0.0
    %392 = vmatpush1.msra.mxu0 0.0
    %393 = vmatprep.subr.mxu0 0.0
    %394 = vmatpush1.msra.mxu0 0.0
    %395 = vmatprep.subr.mxu0 0.0
    %396 = vmatpush1.msra.mxu0 0.0
    %397 = vmatprep.subr.mxu0 0.0
    %398 = vmatpush1.msra.mxu0 0.0
    %399 = vmatprep.subr.mxu0 0.0
    %400 = vmatpush1.msra.mxu0 0.0
    %401 = vmatprep.subr.mxu0 0.0
    %402 = vmatpush1.msra.mxu0 0.0
    %403 = vmatprep.mubr.f32.mxu0 0.0
    %404 = vmatmul.mubr.f32.gmra.mrb[0].mxu0 %v109
    %v405 = vpop.f32.mrb[0].mxu0
    %v406 = vadd.f32 0.0, %v405
    %v407 = vpop.f32.mrb[0].mxu0
    %408 = vmatprep.mubr.f32.mxu0 0.0
    %409 = vmatmul.mubr.f32.gmra.mrb[0].mxu0 %v117
    %v410 = vpop.f32.mrb[0].mxu0
    %v411 = vadd.f32 0.0, %v410
    %v412 = vpop.f32.mrb[0].mxu0
    %413 = vmatprep.mubr.f32.mxu0 0.0
    %414 = vmatmul.mubr.f32.gmra.mrb[0].mxu0 %v112
    %v415 = vpop.f32.mrb[0].mxu0
    %v416 = vadd.f32 0.0, %v415
    %v417 = vpop.f32.mrb[0].mxu0
    %418 = vmatprep.mubr.f32.mxu0 0.0
    %419 = vmatmul.mubr.f32.gmra.mrb[0].mxu0 %v118
    %v420 = vpop.f32.mrb[0].mxu0
    %v421 = vadd.f32 0.0, %v420
    %v422 = vpop.f32.mrb[0].mxu0
    %423 = vdwg.mxu0
    %v424 = vadd.f32 %v304, %v406
    %v425 = vadd.f32 %v309, %v411
    %v426 = vadd.f32 %v314, %v416
    %v427 = vadd.f32 %v319, %v421
    %v428 = vadd.f32 %v424, %v425
    %v429 = vadd.f32 %v428, %v426
    %v430 = vadd.f32 %v429, %v427
    %v431 = vrot.slane %v430, 4
    %v432 = vadd.f32 %v430, %v431
    %v433 = vrot.slane %v432, 2
    %v434 = vadd.f32 %v432, %v433
    %v435 = vrot.slane %v434, 1
    %v436 = vadd.f32 %v434, %v435
    %v437 = vmul.f32 %v424, %v424
    %v438 = vmul.f32 %v425, %v425
    %v439 = vmul.f32 %v426, %v426
    %v440 = vmul.f32 %v427, %v427
    %v441 = vadd.f32 %v437, %v438
    %v442 = vadd.f32 %v441, %v439
    %v443 = vadd.f32 %v442, %v440
    %v444 = vrot.slane %v443, 4
    %v445 = vadd.f32 %v443, %v444
    %v446 = vrot.slane %v445, 2
    %v447 = vadd.f32 %v445, %v446
    %v448 = vrot.slane %v447, 1
    %v449 = vadd.f32 %v447, %v448
    %v450 = vsel %vm93, %v436, %v449
    %v451 = vld [vmem:[#allocation8] sm:$0xff]
    %v452 = vld [vmem:[#allocation8 + $0x8] sm:$0xff]
    %v453 = vld [vmem:[#allocation8 + $0x10] sm:$0xff]
    %v454 = vld [vmem:[#allocation8 + $0x18] sm:$0xff]
    %v455 = vld [vmem:[#allocation8 + $0x20] sm:$0xff]
    %v456 = vld [vmem:[#allocation8 + $0x28] sm:$0xff]
    %v457 = vld [vmem:[#allocation8 + $0x30] sm:$0xff]
    %v458 = vld [vmem:[#allocation8 + $0x38] sm:$0xff]
    %v459 = vld [vmem:[#allocation8 + $0x40] sm:$0xff]
    %v460 = vld [vmem:[#allocation8 + $0x48] sm:$0xff]
    %v461 = vld [vmem:[#allocation8 + $0x50] sm:$0xff]
    %v462 = vld [vmem:[#allocation8 + $0x58] sm:$0xff]
    %v463 = vld [vmem:[#allocation8 + $0x60] sm:$0xff]
    %v464 = vld [vmem:[#allocation8 + $0x68] sm:$0xff]
    %v465 = vld [vmem:[#allocation8 + $0x70] sm:$0xff]
    %v466 = vld [vmem:[#allocation8 + $0x78] sm:$0xff]
    %467 = vmatprep.subr.mxu0 0.0
    %468 = vmatpush1.msra.mxu0 %v451
    %469 = vmatprep.subr.mxu0 0.0
    %470 = vmatpush1.msra.mxu0 %v452
    %471 = vmatprep.subr.mxu0 0.0
    %472 = vmatpush1.msra.mxu0 %v453
    %473 = vmatprep.subr.mxu0 0.0
    %474 = vmatpush1.msra.mxu0 %v454
    %475 = vmatprep.subr.mxu0 0.0
    %476 = vmatpush1.msra.mxu0 %v455
    %477 = vmatprep.subr.mxu0 0.0
    %478 = vmatpush1.msra.mxu0 %v456
    %479 = vmatprep.subr.mxu0 0.0
    %480 = vmatpush1.msra.mxu0 %v457
    %481 = vmatprep.subr.mxu0 0.0
    %482 = vmatpush1.msra.mxu0 %v458
    %483 = vmatprep.subr.mxu0 0.0
    %484 = vmatpush1.msra.mxu0 %v459
    %485 = vmatprep.subr.mxu0 0.0
    %486 = vmatpush1.msra.mxu0 %v460
    %487 = vmatprep.subr.mxu0 0.0
    %488 = vmatpush1.msra.mxu0 %v461
    %489 = vmatprep.subr.mxu0 0.0
    %490 = vmatpush1.msra.mxu0 %v462
    %491 = vmatprep.subr.mxu0 0.0
    %492 = vmatpush1.msra.mxu0 %v463
    %493 = vmatprep.subr.mxu0 0.0
    %494 = vmatpush1.msra.mxu0 %v464
    %495 = vmatprep.subr.mxu0 0.0
    %496 = vmatpush1.msra.mxu0 %v465
    %497 = vmatprep.subr.mxu0 0.0
    %498 = vmatpush1.msra.mxu0 %v466
    %499 = vmatprep.subr.mxu0 0.0
    %500 = vmatpush1.msra.mxu0 0.0
    %501 = vmatprep.subr.mxu0 0.0
    %502 = vmatpush1.msra.mxu0 0.0
    %503 = vmatprep.subr.mxu0 0.0
    %504 = vmatpush1.msra.mxu0 0.0
    %505 = vmatprep.subr.mxu0 0.0
    %506 = vmatpush1.msra.mxu0 0.0
    %507 = vmatprep.subr.mxu0 0.0
    %508 = vmatpush1.msra.mxu0 0.0
    %509 = vmatprep.subr.mxu0 0.0
    %510 = vmatpush1.msra.mxu0 0.0
    %511 = vmatprep.subr.mxu0 0.0
    %512 = vmatpush1.msra.mxu0 0.0
    %513 = vmatprep.subr.mxu0 0.0
    %514 = vmatpush1.msra.mxu0 0.0
    %515 = vmatprep.subr.mxu0 0.0
    %516 = vmatpush1.msra.mxu0 0.0
    %517 = vmatprep.subr.mxu0 0.0
    %518 = vmatpush1.msra.mxu0 0.0
    %519 = vmatprep.subr.mxu0 0.0
    %520 = vmatpush1.msra.mxu0 0.0
    %521 = vmatprep.subr.mxu0 0.0
    %522 = vmatpush1.msra.mxu0 0.0
    %523 = vmatprep.subr.mxu0 0.0
    %524 = vmatpush1.msra.mxu0 0.0
    %525 = vmatprep.subr.mxu0 0.0
    %526 = vmatpush1.msra.mxu0 0.0
    %527 = vmatprep.subr.mxu0 0.0
    %528 = vmatpush1.msra.mxu0 0.0
    %529 = vmatprep.subr.mxu0 0.0
    %530 = vmatpush1.msra.mxu0 0.0
    %531 = vmatprep.mubr.f32.mxu0 0.0
    %532 = vmatmul.mubr.f32.gmra.mrb[0].mxu0 %v450
    %v533 = vpop.f32.mrb[0].mxu0
    %v534 = vadd.f32 0.0, %v533
    %v535 = vpop.f32.mrb[0].mxu0
    %536 = vdwg.mxu0
    %v537 = vmul.f32 %v534, 0.001953125
    %v538 = vmul.f32 %v537, %v537
    %v540 = vrot.slane %v538, 7
    %v542 = vsub.f32 %v537, %v540
    %v543 = vld [vmem:[%s4] sm:$0x1]
    %v544 = vadd.f32 %v542, 1e-05
    %v545 = vrsqrt.pop %v544
    %v548 = vunpack.c.l.s4 1966171168
    %v549 = vunpack.c.0.s8 %v548
    %v550 = vlaneseq
    %v551 = vshrl.u32 %v550, 7
    %v552 = vsub.s32 %v549, %v551
    %v553 = vrot.slane %v545, %v552
    %v554 = vcombine.high %v553, %v553
    %v556 = vunpack.c.l.s4 1966171168
    %v557 = vunpack.c.0.s8 %v556
    %v558 = vlaneseq
    %v559 = vshrl.u32 %v558, 7
    %v560 = vsub.s32 %v557, %v559
    %v561 = vrot.slane %v554, %v560
    %v563 = vmul.f32 %v543, %v561
    %v564 = vld [vmem:[%s5] sm:$0x1]
    %v565 = vmul.f32 %v537, %v563
    %v566 = vsub.f32 %v564, %v565
    %v568 = vlaneseq
    %v569 = vshrl.u32 %v568, 7
    %v570 = vsub.s32 0, %v569
    %v571 = vrot.slane %v563, %v570
    %v573 = vmul.f32 %v424, %v571
    %v574 = vmul.f32 %v425, %v571
    %v575 = vmul.f32 %v426, %v571
    %v576 = vmul.f32 %v427, %v571
    %v578 = vlaneseq
    %v579 = vshrl.u32 %v578, 7
    %v580 = vsub.s32 0, %v579
    %v581 = vrot.slane %v566, %v580
    %v583 = vadd.f32 %v573, %v581
    %v584 = vadd.f32 %v574, %v581
    %v585 = vadd.f32 %v575, %v581
    %v586 = vadd.f32 %v576, %v581
    %v587 = vmax.f32 %v583, 0.0
    %v588 = vmax.f32 %v584, 0.0
    %v589 = vmax.f32 %v585, 0.0
    %v590 = vmax.f32 %v586, 0.0
    %v595 = vrot.slane %v587, 7
    %v596 = vrot.slane %v588, 7
    %v597 = vsel %vm93, %v595, %v596
    %v598 = vrot.slane %v589, 7
    %v599 = vrot.slane %v590, 7
    %v600 = vsel %vm93, %v598, %v599
    %v605 = vsel %vm93, 0.0, %v595
    %v606 = vsel %vm93, 0.0, %v598
    %v607 = vrot.slane %v587, 1
    %v608 = vrot.slane %v588, 1
    %v609 = vsel %vm106, %v607, %v608
    %v610 = vrot.slane %v589, 1
    %v611 = vrot.slane %v590, 1
    %v612 = vsel %vm106, %v610, %v611
    %v617 = vsel %vm106, %v608, 0.0
    %v618 = vsel %vm106, %v611, 0.0
    %v619 = vld [vmem:[#allocation7] sm:$0xff]
    %v620 = vld [vmem:[#allocation7 + $0x8] sm:$0xff]
    %v621 = vld [vmem:[#allocation7 + $0x10] sm:$0xff]
    %v622 = vld [vmem:[#allocation7 + $0x18] sm:$0xff]
    %v623 = vld [vmem:[#allocation7 + $0x20] sm:$0xff]
    %v624 = vld [vmem:[#allocation7 + $0x28] sm:$0xff]
    %v625 = vld [vmem:[#allocation7 + $0x30] sm:$0xff]
    %v626 = vld [vmem:[#allocation7 + $0x38] sm:$0xff]
    %v627 = vld [vmem:[#allocation7 + $0x40] sm:$0xff]
    %v628 = vld [vmem:[#allocation7 + $0x48] sm:$0xff]
    %v629 = vld [vmem:[#allocation7 + $0x50] sm:$0xff]
    %v630 = vld [vmem:[#allocation7 + $0x58] sm:$0xff]
    %v631 = vld [vmem:[#allocation7 + $0x60] sm:$0xff]
    %v632 = vld [vmem:[#allocation7 + $0x68] sm:$0xff]
    %v633 = vld [vmem:[#allocation7 + $0x70] sm:$0xff]
    %v634 = vld [vmem:[#allocation7 + $0x78] sm:$0xff]
    %s635 = scalar_lea.vmem [#allocation7], 128
    %v636 = vld [vmem:[%s635] sm:$0xff]
    %v637 = vld [vmem:[%s635 + $0x8] sm:$0xff]
    %v638 = vld [vmem:[%s635 + $0x10] sm:$0xff]
    %v639 = vld [vmem:[%s635 + $0x18] sm:$0xff]
    %v640 = vld [vmem:[%s635 + $0x20] sm:$0xff]
    %v641 = vld [vmem:[%s635 + $0x28] sm:$0xff]
    %v642 = vld [vmem:[%s635 + $0x30] sm:$0xff]
    %v643 = vld [vmem:[%s635 + $0x38] sm:$0xff]
    %v644 = vld [vmem:[%s635 + $0x40] sm:$0xff]
    %v645 = vld [vmem:[%s635 + $0x48] sm:$0xff]
    %v646 = vld [vmem:[%s635 + $0x50] sm:$0xff]
    %v647 = vld [vmem:[%s635 + $0x58] sm:$0xff]
    %v648 = vld [vmem:[%s635 + $0x60] sm:$0xff]
    %v649 = vld [vmem:[%s635 + $0x68] sm:$0xff]
    %v650 = vld [vmem:[%s635 + $0x70] sm:$0xff]
    %v651 = vld [vmem:[%s635 + $0x78] sm:$0xff]
    %652 = vmatprep.subr.mxu0 0.0
    %653 = vmatpush1.msra.mxu0 %v636
    %654 = vmatprep.subr.mxu0 0.0
    %655 = vmatpush1.msra.mxu0 %v637
    %656 = vmatprep.subr.mxu0 0.0
    %657 = vmatpush1.msra.mxu0 %v638
    %658 = vmatprep.subr.mxu0 0.0
    %659 = vmatpush1.msra.mxu0 %v639
    %660 = vmatprep.subr.mxu0 0.0
    %661 = vmatpush1.msra.mxu0 %v640
    %662 = vmatprep.subr.mxu0 0.0
    %663 = vmatpush1.msra.mxu0 %v641
    %664 = vmatprep.subr.mxu0 0.0
    %665 = vmatpush1.msra.mxu0 %v642
    %666 = vmatprep.subr.mxu0 0.0
    %667 = vmatpush1.msra.mxu0 %v643
    %668 = vmatprep.subr.mxu0 0.0
    %669 = vmatpush1.msra.mxu0 %v644
    %670 = vmatprep.subr.mxu0 0.0
    %671 = vmatpush1.msra.mxu0 %v645
    %672 = vmatprep.subr.mxu0 0.0
    %673 = vmatpush1.msra.mxu0 %v646
    %674 = vmatprep.subr.mxu0 0.0
    %675 = vmatpush1.msra.mxu0 %v647
    %676 = vmatprep.subr.mxu0 0.0
    %677 = vmatpush1.msra.mxu0 %v648
    %678 = vmatprep.subr.mxu0 0.0
    %679 = vmatpush1.msra.mxu0 %v649
    %680 = vmatprep.subr.mxu0 0.0
    %681 = vmatpush1.msra.mxu0 %v650
    %682 = vmatprep.subr.mxu0 0.0
    %683 = vmatpush1.msra.mxu0 %v651
    %684 = vmatprep.subr.mxu0 0.0
    %685 = vmatpush1.msra.mxu0 0.0
    %686 = vmatprep.subr.mxu0 0.0
    %687 = vmatpush1.msra.mxu0 0.0
    %688 = vmatprep.subr.mxu0 0.0
    %689 = vmatpush1.msra.mxu0 0.0
    %690 = vmatprep.subr.mxu0 0.0
    %691 = vmatpush1.msra.mxu0 0.0
    %692 = vmatprep.subr.mxu0 0.0
    %693 = vmatpush1.msra.mxu0 0.0
    %694 = vmatprep.subr.mxu0 0.0
    %695 = vmatpush1.msra.mxu0 0.0
    %696 = vmatprep.subr.mxu0 0.0
    %697 = vmatpush1.msra.mxu0 0.0
    %698 = vmatprep.subr.mxu0 0.0
    %699 = vmatpush1.msra.mxu0 0.0
    %700 = vmatprep.subr.mxu0 0.0
    %701 = vmatpush1.msra.mxu0 0.0
    %702 = vmatprep.subr.mxu0 0.0
    %703 = vmatpush1.msra.mxu0 0.0
    %704 = vmatprep.subr.mxu0 0.0
    %705 = vmatpush1.msra.mxu0 0.0
    %706 = vmatprep.subr.mxu0 0.0
    %707 = vmatpush1.msra.mxu0 0.0
    %708 = vmatprep.subr.mxu0 0.0
    %709 = vmatpush1.msra.mxu0 0.0
    %710 = vmatprep.subr.mxu0 0.0
    %711 = vmatpush1.msra.mxu0 0.0
    %712 = vmatprep.subr.mxu0 0.0
    %713 = vmatpush1.msra.mxu0 0.0
    %714 = vmatprep.subr.mxu0 0.0
    %715 = vmatpush1.msra.mxu0 0.0
    %716 = vmatprep.mubr.f32.mxu0 0.0
    %717 = vmatmul.mubr.f32.gmra.mrb[0].mxu0 %v587
    %v718 = vpop.f32.mrb[0].mxu0
    %v719 = vadd.f32 0.0, %v718
    %v720 = vpop.f32.mrb[0].mxu0
    %721 = vmatprep.mubr.f32.mxu0 0.0
    %722 = vmatmul.mubr.f32.gmra.mrb[0].mxu0 %v588
    %v723 = vpop.f32.mrb[0].mxu0
    %v724 = vadd.f32 0.0, %v723
    %v725 = vpop.f32.mrb[0].mxu0
    %726 = vmatprep.mubr.f32.mxu0 0.0
    %727 = vmatmul.mubr.f32.gmra.mrb[0].mxu0 %v589
    %v728 = vpop.f32.mrb[0].mxu0
    %v729 = vadd.f32 0.0, %v728
    %v730 = vpop.f32.mrb[0].mxu0
    %731 = vmatprep.mubr.f32.mxu0 0.0
    %732 = vmatmul.mubr.f32.gmra.mrb[0].mxu0 %v590
    %v733 = vpop.f32.mrb[0].mxu0
    %v734 = vadd.f32 0.0, %v733
    %v735 = vpop.f32.mrb[0].mxu0
    %736 = vdwg.mxu0
    %737 = vmatprep.subr.mxu0 0.0
    %738 = vmatpush1.msra.mxu0 %v619
    %739 = vmatprep.subr.mxu0 0.0
    %740 = vmatpush1.msra.mxu0 %v620
    %741 = vmatprep.subr.mxu0 0.0
    %742 = vmatpush1.msra.mxu0 %v621
    %743 = vmatprep.subr.mxu0 0.0
    %744 = vmatpush1.msra.mxu0 %v622
    %745 = vmatprep.subr.mxu0 0.0
    %746 = vmatpush1.msra.mxu0 %v623
    %747 = vmatprep.subr.mxu0 0.0
    %748 = vmatpush1.msra.mxu0 %v624
    %749 = vmatprep.subr.mxu0 0.0
    %750 = vmatpush1.msra.mxu0 %v625
    %751 = vmatprep.subr.mxu0 0.0
    %752 = vmatpush1.msra.mxu0 %v626
    %753 = vmatprep.subr.mxu0 0.0
    %754 = vmatpush1.msra.mxu0 %v627
    %755 = vmatprep.subr.mxu0 0.0
    %756 = vmatpush1.msra.mxu0 %v628
    %757 = vmatprep.subr.mxu0 0.0
    %758 = vmatpush1.msra.mxu0 %v629
    %759 = vmatprep.subr.mxu0 0.0
    %760 = vmatpush1.msra.mxu0 %v630
    %761 = vmatprep.subr.mxu0 0.0
    %762 = vmatpush1.msra.mxu0 %v631
    %763 = vmatprep.subr.mxu0 0.0
    %764 = vmatpush1.msra.mxu0 %v632
    %765 = vmatprep.subr.mxu0 0.0
    %766 = vmatpush1.msra.mxu0 %v633
    %767 = vmatprep.subr.mxu0 0.0
    %768 = vmatpush1.msra.mxu0 %v634
    %769 = vmatprep.subr.mxu0 0.0
    %770 = vmatpush1.msra.mxu0 0.0
    %771 = vmatprep.subr.mxu0 0.0
    %772 = vmatpush1.msra.mxu0 0.0
    %773 = vmatprep.subr.mxu0 0.0
    %774 = vmatpush1.msra.mxu0 0.0
    %775 = vmatprep.subr.mxu0 0.0
    %776 = vmatpush1.msra.mxu0 0.0
    %777 = vmatprep.subr.mxu0 0.0
    %778 = vmatpush1.msra.mxu0 0.0
    %779 = vmatprep.subr.mxu0 0.0
    %780 = vmatpush1.msra.mxu0 0.0
    %781 = vmatprep.subr.mxu0 0.0
    %782 = vmatpush1.msra.mxu0 0.0
    %783 = vmatprep.subr.mxu0 0.0
    %784 = vmatpush1.msra.mxu0 0.0
    %785 = vmatprep.subr.mxu0 0.0
    %786 = vmatpush1.msra.mxu0 0.0
    %787 = vmatprep.subr.mxu0 0.0
    %788 = vmatpush1.msra.mxu0 0.0
    %789 = vmatprep.subr.mxu0 0.0
    %790 = vmatpush1.msra.mxu0 0.0
    %791 = vmatprep.subr.mxu0 0.0
    %792 = vmatpush1.msra.mxu0 0.0
    %793 = vmatprep.subr.mxu0 0.0
    %794 = vmatpush1.msra.mxu0 0.0
    %795 = vmatprep.subr.mxu0 0.0
    %796 = vmatpush1.msra.mxu0 0.0
    %797 = vmatprep.subr.mxu0 0.0
    %798 = vmatpush1.msra.mxu0 0.0
    %799 = vmatprep.subr.mxu0 0.0
    %800 = vmatpush1.msra.mxu0 0.0
    %801 = vmatprep.mubr.f32.mxu0 0.0
    %802 = vmatmul.mubr.f32.gmra.mrb[0].mxu0 %v605
    %v803 = vpop.f32.mrb[0].mxu0
    %v804 = vadd.f32 %v719, %v803
    %v805 = vpop.f32.mrb[0].mxu0
    %806 = vmatprep.mubr.f32.mxu0 0.0
    %807 = vmatmul.mubr.f32.gmra.mrb[0].mxu0 %v597
    %v808 = vpop.f32.mrb[0].mxu0
    %v809 = vadd.f32 %v724, %v808
    %v810 = vpop.f32.mrb[0].mxu0
    %811 = vmatprep.mubr.f32.mxu0 0.0
    %812 = vmatmul.mubr.f32.gmra.mrb[0].mxu0 %v606
    %v813 = vpop.f32.mrb[0].mxu0
    %v814 = vadd.f32 %v729, %v813
    %v815 = vpop.f32.mrb[0].mxu0
    %816 = vmatprep.mubr.f32.mxu0 0.0
    %817 = vmatmul.mubr.f32.gmra.mrb[0].mxu0 %v600
    %v818 = vpop.f32.mrb[0].mxu0
    %v819 = vadd.f32 %v734, %v818
    %v820 = vpop.f32.mrb[0].mxu0
    %821 = vdwg.mxu0
    %s822 = scalar_lea.vmem [#allocation7], 256
    %v823 = vld [vmem:[%s822] sm:$0xff]
    %v824 = vld [vmem:[%s822 + $0x8] sm:$0xff]
    %v825 = vld [vmem:[%s822 + $0x10] sm:$0xff]
    %v826 = vld [vmem:[%s822 + $0x18] sm:$0xff]
    %v827 = vld [vmem:[%s822 + $0x20] sm:$0xff]
    %v828 = vld [vmem:[%s822 + $0x28] sm:$0xff]
    %v829 = vld [vmem:[%s822 + $0x30] sm:$0xff]
    %v830 = vld [vmem:[%s822 + $0x38] sm:$0xff]
    %v831 = vld [vmem:[%s822 + $0x40] sm:$0xff]
    %v832 = vld [vmem:[%s822 + $0x48] sm:$0xff]
    %v833 = vld [vmem:[%s822 + $0x50] sm:$0xff]
    %v834 = vld [vmem:[%s822 + $0x58] sm:$0xff]
    %v835 = vld [vmem:[%s822 + $0x60] sm:$0xff]
    %v836 = vld [vmem:[%s822 + $0x68] sm:$0xff]
    %v837 = vld [vmem:[%s822 + $0x70] sm:$0xff]
    %v838 = vld [vmem:[%s822 + $0x78] sm:$0xff]
    %839 = vmatprep.subr.mxu0 0.0
    %840 = vmatpush1.msra.mxu0 %v823
    %841 = vmatprep.subr.mxu0 0.0
    %842 = vmatpush1.msra.mxu0 %v824
    %843 = vmatprep.subr.mxu0 0.0
    %844 = vmatpush1.msra.mxu0 %v825
    %845 = vmatprep.subr.mxu0 0.0
    %846 = vmatpush1.msra.mxu0 %v826
    %847 = vmatprep.subr.mxu0 0.0
    %848 = vmatpush1.msra.mxu0 %v827
    %849 = vmatprep.subr.mxu0 0.0
    %850 = vmatpush1.msra.mxu0 %v828
    %851 = vmatprep.subr.mxu0 0.0
    %852 = vmatpush1.msra.mxu0 %v829
    %853 = vmatprep.subr.mxu0 0.0
    %854 = vmatpush1.msra.mxu0 %v830
    %855 = vmatprep.subr.mxu0 0.0
    %856 = vmatpush1.msra.mxu0 %v831
    %857 = vmatprep.subr.mxu0 0.0
    %858 = vmatpush1.msra.mxu0 %v832
    %859 = vmatprep.subr.mxu0 0.0
    %860 = vmatpush1.msra.mxu0 %v833
    %861 = vmatprep.subr.mxu0 0.0
    %862 = vmatpush1.msra.mxu0 %v834
    %863 = vmatprep.subr.mxu0 0.0
    %864 = vmatpush1.msra.mxu0 %v835
    %865 = vmatprep.subr.mxu0 0.0
    %866 = vmatpush1.msra.mxu0 %v836
    %867 = vmatprep.subr.mxu0 0.0
    %868 = vmatpush1.msra.mxu0 %v837
    %869 = vmatprep.subr.mxu0 0.0
    %870 = vmatpush1.msra.mxu0 %v838
    %871 = vmatprep.subr.mxu0 0.0
    %872 = vmatpush1.msra.mxu0 0.0
    %873 = vmatprep.subr.mxu0 0.0
    %874 = vmatpush1.msra.mxu0 0.0
    %875 = vmatprep.subr.mxu0 0.0
    %876 = vmatpush1.msra.mxu0 0.0
    %877 = vmatprep.subr.mxu0 0.0
    %878 = vmatpush1.msra.mxu0 0.0
    %879 = vmatprep.subr.mxu0 0.0
    %880 = vmatpush1.msra.mxu0 0.0
    %881 = vmatprep.subr.mxu0 0.0
    %882 = vmatpush1.msra.mxu0 0.0
    %883 = vmatprep.subr.mxu0 0.0
    %884 = vmatpush1.msra.mxu0 0.0
    %885 = vmatprep.subr.mxu0 0.0
    %886 = vmatpush1.msra.mxu0 0.0
    %887 = vmatprep.subr.mxu0 0.0
    %888 = vmatpush1.msra.mxu0 0.0
    %889 = vmatprep.subr.mxu0 0.0
    %890 = vmatpush1.msra.mxu0 0.0
    %891 = vmatprep.subr.mxu0 0.0
    %892 = vmatpush1.msra.mxu0 0.0
    %893 = vmatprep.subr.mxu0 0.0
    %894 = vmatpush1.msra.mxu0 0.0
    %895 = vmatprep.subr.mxu0 0.0
    %896 = vmatpush1.msra.mxu0 0.0
    %897 = vmatprep.subr.mxu0 0.0
    %898 = vmatpush1.msra.mxu0 0.0
    %899 = vmatprep.subr.mxu0 0.0
    %900 = vmatpush1.msra.mxu0 0.0
    %901 = vmatprep.subr.mxu0 0.0
    %902 = vmatpush1.msra.mxu0 0.0
    %903 = vmatprep.mubr.f32.mxu0 0.0
    %904 = vmatmul.mubr.f32.gmra.mrb[0].mxu0 %v609
    %v905 = vpop.f32.mrb[0].mxu0
    %v906 = vadd.f32 0.0, %v905
    %v907 = vpop.f32.mrb[0].mxu0
    %908 = vmatprep.mubr.f32.mxu0 0.0
    %909 = vmatmul.mubr.f32.gmra.mrb[0].mxu0 %v617
    %v910 = vpop.f32.mrb[0].mxu0
    %v911 = vadd.f32 0.0, %v910
    %v912 = vpop.f32.mrb[0].mxu0
    %913 = vmatprep.mubr.f32.mxu0 0.0
    %914 = vmatmul.mubr.f32.gmra.mrb[0].mxu0 %v612
    %v915 = vpop.f32.mrb[0].mxu0
    %v916 = vadd.f32 0.0, %v915
    %v917 = vpop.f32.mrb[0].mxu0
    %918 = vmatprep.mubr.f32.mxu0 0.0
    %919 = vmatmul.mubr.f32.gmra.mrb[0].mxu0 %v618
    %v920 = vpop.f32.mrb[0].mxu0
    %v921 = vadd.f32 0.0, %v920
    %v922 = vpop.f32.mrb[0].mxu0
    %923 = vdwg.mxu0
    %v924 = vadd.f32 %v804, %v906
    %v925 = vadd.f32 %v809, %v911
    %v926 = vadd.f32 %v814, %v916
    %v927 = vadd.f32 %v819, %v921
    %v928 = vadd.f32 %v924, %v925
    %v929 = vadd.f32 %v928, %v926
    %v930 = vadd.f32 %v929, %v927
    %v931 = vrot.slane %v930, 4
    %v932 = vadd.f32 %v930, %v931
    %v933 = vrot.slane %v932, 2
    %v934 = vadd.f32 %v932, %v933
    %v935 = vrot.slane %v934, 1
    %v936 = vadd.f32 %v934, %v935
    %v937 = vmul.f32 %v924, %v924
    %v938 = vmul.f32 %v925, %v925
    %v939 = vmul.f32 %v926, %v926
    %v940 = vmul.f32 %v927, %v927
    %v941 = vadd.f32 %v937, %v938
    %v942 = vadd.f32 %v941, %v939
    %v943 = vadd.f32 %v942, %v940
    %v944 = vrot.slane %v943, 4
    %v945 = vadd.f32 %v943, %v944
    %v946 = vrot.slane %v945, 2
    %v947 = vadd.f32 %v945, %v946
    %v948 = vrot.slane %v947, 1
    %v949 = vadd.f32 %v947, %v948
    %v950 = vsel %vm93, %v936, %v949
    %951 = vmatprep.subr.mxu0 0.0
    %952 = vmatpush1.msra.mxu0 %v451
    %953 = vmatprep.subr.mxu0 0.0
    %954 = vmatpush1.msra.mxu0 %v452
    %955 = vmatprep.subr.mxu0 0.0
    %956 = vmatpush1.msra.mxu0 %v453
    %957 = vmatprep.subr.mxu0 0.0
    %958 = vmatpush1.msra.mxu0 %v454
    %959 = vmatprep.subr.mxu0 0.0
    %960 = vmatpush1.msra.mxu0 %v455
    %961 = vmatprep.subr.mxu0 0.0
    %962 = vmatpush1.msra.mxu0 %v456
    %963 = vmatprep.subr.mxu0 0.0
    %964 = vmatpush1.msra.mxu0 %v457
    %965 = vmatprep.subr.mxu0 0.0
    %966 = vmatpush1.msra.mxu0 %v458
    %967 = vmatprep.subr.mxu0 0.0
    %968 = vmatpush1.msra.mxu0 %v459
    %969 = vmatprep.subr.mxu0 0.0
    %970 = vmatpush1.msra.mxu0 %v460
    %971 = vmatprep.subr.mxu0 0.0
    %972 = vmatpush1.msra.mxu0 %v461
    %973 = vmatprep.subr.mxu0 0.0
    %974 = vmatpush1.msra.mxu0 %v462
    %975 = vmatprep.subr.mxu0 0.0
    %976 = vmatpush1.msra.mxu0 %v463
    %977 = vmatprep.subr.mxu0 0.0
    %978 = vmatpush1.msra.mxu0 %v464
    %979 = vmatprep.subr.mxu0 0.0
    %980 = vmatpush1.msra.mxu0 %v465
    %981 = vmatprep.subr.mxu0 0.0
    %982 = vmatpush1.msra.mxu0 %v466
    %983 = vmatprep.subr.mxu0 0.0
    %984 = vmatpush1.msra.mxu0 0.0
    %985 = vmatprep.subr.mxu0 0.0
    %986 = vmatpush1.msra.mxu0 0.0
    %987 = vmatprep.subr.mxu0 0.0
    %988 = vmatpush1.msra.mxu0 0.0
    %989 = vmatprep.subr.mxu0 0.0
    %990 = vmatpush1.msra.mxu0 0.0
    %991 = vmatprep.subr.mxu0 0.0
    %992 = vmatpush1.msra.mxu0 0.0
    %993 = vmatprep.subr.mxu0 0.0
    %994 = vmatpush1.msra.mxu0 0.0
    %995 = vmatprep.subr.mxu0 0.0
    %996 = vmatpush1.msra.mxu0 0.0
    %997 = vmatprep.subr.mxu0 0.0
    %998 = vmatpush1.msra.mxu0 0.0
    %999 = vmatprep.subr.mxu0 0.0
    %1000 = vmatpush1.msra.mxu0 0.0
    %1001 = vmatprep.subr.mxu0 0.0
    %1002 = vmatpush1.msra.mxu0 0.0
    %1003 = vmatprep.subr.mxu0 0.0
    %1004 = vmatpush1.msra.mxu0 0.0
    %1005 = vmatprep.subr.mxu0 0.0
    %1006 = vmatpush1.msra.mxu0 0.0
    %1007 = vmatprep.subr.mxu0 0.0
    %1008 = vmatpush1.msra.mxu0 0.0
    %1009 = vmatprep.subr.mxu0 0.0
    %1010 = vmatpush1.msra.mxu0 0.0
    %1011 = vmatprep.subr.mxu0 0.0
    %1012 = vmatpush1.msra.mxu0 0.0
    %1013 = vmatprep.subr.mxu0 0.0
    %1014 = vmatpush1.msra.mxu0 0.0
    %1015 = vmatprep.mubr.f32.mxu0 0.0
    %1016 = vmatmul.mubr.f32.gmra.mrb[0].mxu0 %v950
    %v1017 = vpop.f32.mrb[0].mxu0
    %v1018 = vadd.f32 0.0, %v1017
    %v1019 = vpop.f32.mrb[0].mxu0
    %1020 = vdwg.mxu0
    %v1021 = vmul.f32 %v1018, 0.001953125
    %v1022 = vmul.f32 %v1021, %v1021
    %v1024 = vrot.slane %v1022, 7
    %v1026 = vsub.f32 %v1021, %v1024
    %v1027 = vld [vmem:[%s6] sm:$0x1]
    %v1028 = vadd.f32 %v1026, 1e-05
    %v1029 = vrsqrt.pop %v1028
    %v1032 = vunpack.c.l.s4 1966171168
    %v1033 = vunpack.c.0.s8 %v1032
    %v1034 = vlaneseq
    %v1035 = vshrl.u32 %v1034, 7
    %v1036 = vsub.s32 %v1033, %v1035
    %v1037 = vrot.slane %v1029, %v1036
    %v1038 = vcombine.high %v1037, %v1037
    %v1040 = vunpack.c.l.s4 1966171168
    %v1041 = vunpack.c.0.s8 %v1040
    %v1042 = vlaneseq
    %v1043 = vshrl.u32 %v1042, 7
    %v1044 = vsub.s32 %v1041, %v1043
    %v1045 = vrot.slane %v1038, %v1044
    %v1047 = vmul.f32 %v1027, %v1045
    %v1048 = vld [vmem:[%s7] sm:$0x1]
    %v1049 = vmul.f32 %v1021, %v1047
    %v1050 = vsub.f32 %v1048, %v1049
    %v1052 = vlaneseq
    %v1053 = vshrl.u32 %v1052, 7
    %v1054 = vsub.s32 0, %v1053
    %v1055 = vrot.slane %v1047, %v1054
    %v1057 = vmul.f32 %v924, %v1055
    %v1058 = vmul.f32 %v925, %v1055
    %v1059 = vmul.f32 %v926, %v1055
    %v1060 = vmul.f32 %v927, %v1055
    %v1062 = vlaneseq
    %v1063 = vshrl.u32 %v1062, 7
    %v1064 = vsub.s32 0, %v1063
    %v1065 = vrot.slane %v1050, %v1064
    %v1067 = vadd.f32 %v1057, %v1065
    %v1068 = vadd.f32 %v1058, %v1065
    %v1069 = vadd.f32 %v1059, %v1065
    %v1070 = vadd.f32 %v1060, %v1065
    %v1071 = vadd.f32 %v85, %v1067
    %v1072 = vadd.f32 %v86, %v1068
    %v1073 = vadd.f32 %v87, %v1069
    %v1074 = vadd.f32 %v88, %v1070
    %1075 = vst [vmem:[#allocation10] sm:$0xff] %v1071
    %1076 = vst [vmem:[#allocation10 + $0x8] sm:$0xff] %v1072
    %1077 = vst [vmem:[#allocation10 + $0x10] sm:$0xff] %v1073
    %1078 = vst [vmem:[#allocation10 + $0x18] sm:$0xff] %v1074
    // Predicated region
    $region50: #{tpu_custom_call.1} parent=1 // pred_check
      _
    $region51: #{tpu_custom_call.1} parent=1 // pred_check_branch
      %1080 = sbr.rel (0) target = $region53
    $region52: #{tpu_custom_call.1} parent=1 // pred_region
      %s1082 = ssub.s32 512, 512
      %1083 = vsyncadd [#allocation4], %s1082
      %s1084 = sshll.u32 [#allocation10], 4
      %s1085 = int_to_ptr.vmem [resolvable:$true] %s1084
      %1090 = dma.vmem_to_hbm [thread:$0]  %s1085, 512, %s8, [#allocation4], 128, 128, 8
    $region53: #{tpu_custom_call.1} parent=1 // pred_fallthru
      _
    // Predicated region
    $region54: #{tpu_custom_call.1} parent=1 // pred_check
      _
    $region55: #{tpu_custom_call.1} parent=1 // pred_check_branch
      %1092 = sbr.rel (0) target = $region57
    $region56: #{tpu_custom_call.1} parent=1 // pred_region
      %1093 = dma.done [#allocation4], 512
    $region57: #{tpu_custom_call.1} parent=1 // pred_fallthru
      _
    %1094 = vsyncpa [#allocation3], 1
    %1095 = vsyncpa [#allocation6], 1
    %1096 = vsyncpa [#allocation9], 1
    %1097 = vsyncpa [#allocation4], 1

</llo_original>
